<compile_context>
chip_gen: v7x
topology: tpu7x:2x2x1
jax: 0.10.0
libtpu: 0.0.40
codegen_flags: <defaults>
</compile_context>

<pallas_src>
import math

import jax
import jax.numpy as jnp
from jax.experimental import pallas as pl
from jax.experimental.pallas import tpu as pltpu

_INV_SQRT2 = 1.0 / math.sqrt(2.0)


def _round_up(x, m):
    return ((x + m - 1) // m) * m


def _vmem_capacity_bytes(default=64 * 1024 * 1024):
    """Physical per-core VMEM; falls back to a conservative 64 MiB if unqueryable."""
    try:
        info = pltpu.get_tpu_info()
        cap = getattr(info, "vmem_capacity_bytes", None)
        if cap:
            return int(cap)
    except Exception:
        pass
    return default


def _select_tiles(rows, dim_p, hidden_p, x_itemsize, out_itemsize, budget_bytes):
    """Pick (tm, tk): largest row tile that fits the VMEM budget with a decent hidden chunk."""
    rows8 = _round_up(rows, 8)
    tm_cands = [t for t in (1024, 512, 256, 128, 64, 32, 16, 8) if t <= rows8]
    if not tm_cands:
        tm_cands = [rows8]
    n = hidden_p // 128
    tk_divs = sorted({d * 128 for d in range(1, n + 1) if n % d == 0}, reverse=True)

    def working_set(tm, tk):
        return (2 * tm * dim_p * x_itemsize        # x tile (f32, double-buffered)
                + 2 * dim_p * tk * 2               # W1 chunk (bf16, double-buffered)
                + 2 * tk * dim_p * 2               # W2 chunk (bf16, double-buffered)
                + 2 * tk * 4 + 2 * dim_p * 4       # b1 / b2 chunks
                + 2 * tm * dim_p * out_itemsize    # output tile (double-buffered)
                + tm * dim_p * 4                   # f32 accumulator scratch
                + tm * tk * 6)                     # h intermediate (f32 + bf16 temporaries)

    tk_floor = min(512, hidden_p)
    # Pass 1: biggest tm that still allows a reasonably large hidden chunk (>= 512).
    for tm in tm_cands:
        for tk in tk_divs:
            if tk < tk_floor:
                break
            if working_set(tm, tk) <= budget_bytes:
                return tm, tk
    # Pass 2: relax the hidden-chunk floor.
    for tm in tm_cands:
        for tk in tk_divs:
            if working_set(tm, tk) <= budget_bytes:
                return tm, tk
    return tm_cands[-1], tk_divs[-1]


def _ffn_kernel(x_ref, w1_ref, b1_ref, w2_ref, b2_ref, o_ref, acc_ref):
    """One (row_tile, hidden_tile) step: partial x@W1 -> GELU -> @W2, accumulated over hidden."""
    k = pl.program_id(1)

    # Fold the second bias into the accumulator init (once per output tile, not per k-step).
    @pl.when(k == 0)
    def _():
        acc_ref[...] = jnp.broadcast_to(b2_ref[...].astype(jnp.float32), acc_ref.shape)

    # Linear 1 on this hidden chunk (bf16 MXU inputs, f32 accumulation). x is DMA'd as f32
    # and cast here -- avoids a separate XLA cast pass over x in HBM.
    x = x_ref[...].astype(w1_ref.dtype)
    h = jnp.dot(x, w1_ref[...], preferred_element_type=jnp.float32)
    h = h + b1_ref[...].astype(jnp.float32)

    # Exact (erf-based) GELU in f32 -- matches torch nn.GELU default.
    h = 0.5 * h * (1.0 + jax.lax.erf(h * jnp.float32(_INV_SQRT2)))

    # Dropout(p=0.0) is the identity -> nothing to do.

    # Linear 2 partial product for this hidden chunk, accumulated in f32 scratch.
    acc_ref[...] += jnp.dot(h.astype(w2_ref.dtype), w2_ref[...],
                            preferred_element_type=jnp.float32)

    @pl.when(k == pl.num_programs(1) - 1)
    def _():
        o_ref[...] = acc_ref[...].astype(o_ref.dtype)


def prepare_ffn_params(w1, b1, w2, b2, matmul_dtype=jnp.bfloat16):
    """One-time weight prep (pad to lane-dense multiples of 128 + cast to the MXU dtype).

    Hoisted out of feed_forward so the per-call path never re-pads / re-casts full weights.
    w1: [dim, hidden]; b1: [hidden]; w2: [hidden, dim]; b2: [dim].
    """
    dim, hidden = w1.shape
    dim_p = _round_up(dim, 128)
    hidden_p = _round_up(hidden, 128)  # pad to 128 only; tk is later chosen to divide hidden_p

    w1p = w1
    w2p = w2
    if dim_p != dim or hidden_p != hidden:
        w1p = jnp.pad(w1, ((0, dim_p - dim), (0, hidden_p - hidden)))
        w2p = jnp.pad(w2, ((0, hidden_p - hidden), (0, dim_p - dim)))
    b1p = jnp.pad(b1, (0, hidden_p - hidden)).reshape(1, hidden_p).astype(jnp.float32)
    b2p = jnp.pad(b2, (0, dim_p - dim)).reshape(1, dim_p).astype(jnp.float32)

    return {
        "w1": w1p.astype(matmul_dtype),
        "b1": b1p,
        "w2": w2p.astype(matmul_dtype),
        "b2": b2p,
        "dim": dim,
        "hidden": hidden,
        "dim_p": dim_p,
        "hidden_p": hidden_p,
    }


def feed_forward(x, params, *, out_dtype=None):
    """x: [batch, seq, dim]; params: output of prepare_ffn_params."""
    batch, seq, dim = x.shape
    assert dim == params["dim"], "x feature dim does not match prepared params"
    dim_p = params["dim_p"]
    hidden_p = params["hidden_p"]
    rows = batch * seq
    out_dtype = x.dtype if out_dtype is None else out_dtype

    # --- generation-aware VMEM budget & tile selection ---
    vmem_cap = _vmem_capacity_bytes()
    vmem_limit = int(0.82 * vmem_cap)            # ~105 MiB on 128 MiB parts, ~52 MiB on v7x
    budget = vmem_limit - 4 * 1024 * 1024        # headroom for compiler internal scratch
    tm, tk = _select_tiles(rows, dim_p, hidden_p,
                           x_itemsize=jnp.dtype(x.dtype).itemsize,
                           out_itemsize=jnp.dtype(out_dtype).itemsize,
                           budget_bytes=budget)
    rows_p = _round_up(rows, tm)

    # --- per-call activation padding only (no-op when already aligned) ---
    x2d = x.reshape(rows, dim)
    if rows_p != rows or dim_p != dim:
        x2d = jnp.pad(x2d, ((0, rows_p - rows), (0, dim_p - dim)))
    # (Zero-padded dim/hidden columns contribute exactly 0; padded rows/cols are sliced off.)

    grid = (rows_p // tm, hidden_p // tk)  # (parallel rows, arbitrary hidden reduction -- last)

    out2d = pl.pallas_call(
        _ffn_kernel,
        out_shape=jax.ShapeDtypeStruct((rows_p, dim_p), out_dtype),
        grid_spec=pltpu.PrefetchScalarGridSpec(
            num_scalar_prefetch=0,
            grid=grid,
            in_specs=[
                pl.BlockSpec((tm, dim_p), lambda i, k: (i, 0)),   # x row tile (full dim, f32)
                pl.BlockSpec((dim_p, tk), lambda i, k: (0, k)),   # W1 hidden chunk (bf16)
                pl.BlockSpec((1, tk), lambda i, k: (0, k)),       # b1 hidden chunk
                pl.BlockSpec((tk, dim_p), lambda i, k: (k, 0)),   # W2 hidden chunk (bf16)
                pl.BlockSpec((1, dim_p), lambda i, k: (0, 0)),    # b2 (constant block -> resident)
            ],
            out_specs=pl.BlockSpec((tm, dim_p), lambda i, k: (i, 0)),
            scratch_shapes=[pltpu.VMEM((tm, dim_p), jnp.float32)],  # f32 accumulator
        ),
        compiler_params=pltpu.CompilerParams(
            # Row axis shards across TensorCores (v7x megacore); hidden reduction stays last.
            dimension_semantics=("parallel", "arbitrary"),
            vmem_limit_bytes=vmem_limit,
        ),
    )(x2d, params["w1"], params["b1"], params["w2"], params["b2"])

    return out2d[:rows, :dim].reshape(batch, seq, dim)


def init_params(key, dim, hidden_dim, dtype=jnp.float32):
    """Deterministic init mimicking torch.nn.Linear defaults (uniform +/- 1/sqrt(fan_in))."""
    k1, k2, k3, k4 = jax.random.split(key, 4)
    bound1 = 1.0 / math.sqrt(dim)
    bound2 = 1.0 / math.sqrt(hidden_dim)
    w1 = jax.random.uniform(k1, (dim, hidden_dim), dtype, -bound1, bound1)
    b1 = jax.random.uniform(k2, (hidden_dim,), dtype, -bound1, bound1)
    w2 = jax.random.uniform(k3, (hidden_dim, dim), dtype, -bound2, bound2)
    b2 = jax.random.uniform(k4, (dim,), dtype, -bound2, bound2)
    return w1, b1, w2, b2


if __name__ == "__main__":
    key = jax.random.PRNGKey(0)
    kx, kp = jax.random.split(key)

    batch, seq, dim, hidden_dim = 2, 8, 32, 64
    x = jax.random.normal(kx, (batch, seq, dim), dtype=jnp.float32)
    w1, b1, w2, b2 = init_params(kp, dim, hidden_dim)

    # One-time weight prep (pad + bf16 cast hoisted out of the per-call path).
    params = prepare_ffn_params(w1, b1, w2, b2)

    out = feed_forward(x, params)
    out = jax.block_until_ready(out)

    # Pure-JAX reference mirroring kernel numerics: bf16 matmul inputs, f32 accumulation,
    # exact (erf) GELU in f32.
    bf = lambda a: a.astype(jnp.bfloat16).astype(jnp.float32)
    h_ref = jnp.dot(bf(x), bf(w1), preferred_element_type=jnp.float32) + b1
    h_ref = 0.5 * h_ref * (1.0 + jax.lax.erf(h_ref / jnp.sqrt(2.0)))
    ref = jnp.dot(bf(h_ref), bf(w2), preferred_element_type=jnp.float32) + b2

    assert out.shape == (batch, seq, dim)
    max_err = float(jnp.max(jnp.abs(out - ref)))
    assert jnp.allclose(out, ref, atol=5e-2, rtol=5e-2), max_err

    print("KERNEL_OK")
</pallas_src>

<mosaic_0001>
module attributes {stable_mosaic.version = 11 : i64} {
  func.func @_ffn_kernel(%arg0: i32, %arg1: i32, %arg2: memref<16x128xf32, #tpu.memory_space<vmem>>, %arg3: memref<128x128xbf16, #tpu.memory_space<vmem>>, %arg4: memref<1x128xf32, #tpu.memory_space<vmem>>, %arg5: memref<128x128xbf16, #tpu.memory_space<vmem>>, %arg6: memref<1x128xf32, #tpu.memory_space<vmem>>, %arg7: memref<16x128xf32, #tpu.memory_space<vmem>>, %arg8: memref<16x128xf32, #tpu.memory_space<vmem>>) attributes {dimension_semantics = [#tpu.dimension_semantics<parallel>, #tpu.dimension_semantics<arbitrary>], iteration_bounds = array<i64: 1, 1>, scalar_prefetch = 0 : i64, scratch_operands = 1 : i64, tpu.core_type = #tpu.core_type<tc>, window_params = [{transform_indices = @transform_0, window_bounds = array<i64: 16, 128>}, {transform_indices = @transform_1, window_bounds = array<i64: 128, 128>}, {transform_indices = @transform_2, window_bounds = array<i64: 1, 128>}, {transform_indices = @transform_3, window_bounds = array<i64: 128, 128>}, {pipeline_mode = #tpu.pipeline_mode<synchronous>, transform_indices = @transform_4, window_bounds = array<i64: 1, 128>}, {transform_indices = @transform_5, window_bounds = array<i64: 16, 128>}]} {
    %c0_i32 = arith.constant 0 : i32
    %0 = arith.cmpi eq, %arg1, %c0_i32 : i32
    %1 = arith.extui %0 : i1 to i32
    %c0_i32_0 = arith.constant 0 : i32
    %2 = arith.cmpi ne, %1, %c0_i32_0 : i32
    scf.if %2 {
      %c0_18 = arith.constant 0 : index
      %c0_19 = arith.constant 0 : index
      %27 = vector.load %arg6[%c0_18, %c0_19] : memref<1x128xf32, #tpu.memory_space<vmem>>, vector<1x128xf32>
      %28 = vector.shape_cast %27 : vector<1x128xf32> to vector<1x128xf32>
      %29 = vector.broadcast %28 : vector<1x128xf32> to vector<16x128xf32>
      %c0_20 = arith.constant 0 : index
      %c0_21 = arith.constant 0 : index
      %30 = vector.load %arg8[%c0_20, %c0_21] : memref<16x128xf32, #tpu.memory_space<vmem>>, vector<16x128xf32>
      tpu.vector_store %arg8[%c0_20, %c0_21], %29 {strides = array<i32>} : memref<16x128xf32, #tpu.memory_space<vmem>>, vector<16x128xf32>,
    } else {
    }
    %c0 = arith.constant 0 : index
    %c0_1 = arith.constant 0 : index
    %3 = vector.load %arg2[%c0, %c0_1] : memref<16x128xf32, #tpu.memory_space<vmem>>, vector<16x128xf32>
    %4 = arith.truncf %3 : vector<16x128xf32> to vector<16x128xbf16>
    %c0_2 = arith.constant 0 : index
    %c0_3 = arith.constant 0 : index
    %5 = vector.load %arg3[%c0_2, %c0_3] : memref<128x128xbf16, #tpu.memory_space<vmem>>, vector<128x128xbf16>
    %cst = arith.constant dense<0.000000e+00> : vector<16x128xf32>
    %6 = tpu.matmul %4, %5, %cst {dimension_numbers = #tpu.dot_dimension_numbers<[1], [0], [0], [1], [0, 0, 1, 1], [], []>} : vector<16x128xbf16>, vector<128x128xbf16>, vector<16x128xf32> -> vector<16x128xf32>
    %c0_4 = arith.constant 0 : index
    %c0_5 = arith.constant 0 : index
    %7 = vector.load %arg4[%c0_4, %c0_5] : memref<1x128xf32, #tpu.memory_space<vmem>>, vector<1x128xf32>
    %8 = vector.broadcast %7 : vector<1x128xf32> to vector<16x128xf32>
    %9 = arith.addf %6, %8 : vector<16x128xf32>
    %cst_6 = arith.constant 5.000000e-01 : f32
    %10 = vector.broadcast %cst_6 : f32 to vector<16x128xf32>
    %11 = arith.mulf %10, %9 : vector<16x128xf32>
    %cst_7 = arith.constant 0.707106769 : f32
    %12 = vector.broadcast %cst_7 : f32 to vector<16x128xf32>
    %13 = arith.mulf %9, %12 : vector<16x128xf32>
    %14 = math.erf %13 : vector<16x128xf32>
    %cst_8 = arith.constant 1.000000e+00 : f32
    %15 = vector.broadcast %cst_8 : f32 to vector<16x128xf32>
    %16 = arith.addf %15, %14 : vector<16x128xf32>
    %17 = arith.mulf %11, %16 : vector<16x128xf32>
    %c0_9 = arith.constant 0 : index
    %c0_10 = arith.constant 0 : index
    %18 = vector.load %arg8[%c0_9, %c0_10] : memref<16x128xf32, #tpu.memory_space<vmem>>, vector<16x128xf32>
    %19 = arith.truncf %17 : vector<16x128xf32> to vector<16x128xbf16>
    %c0_11 = arith.constant 0 : index
    %c0_12 = arith.constant 0 : index
    %20 = vector.load %arg5[%c0_11, %c0_12] : memref<128x128xbf16, #tpu.memory_space<vmem>>, vector<128x128xbf16>
    %cst_13 = arith.constant dense<0.000000e+00> : vector<16x128xf32>
    %21 = tpu.matmul %19, %20, %cst_13 {dimension_numbers = #tpu.dot_dimension_numbers<[1], [0], [0], [1], [0, 0, 1, 1], [], []>} : vector<16x128xbf16>, vector<128x128xbf16>, vector<16x128xf32> -> vector<16x128xf32>
    %22 = arith.addf %18, %21 : vector<16x128xf32>
    %c0_14 = arith.constant 0 : index
    %c0_15 = arith.constant 0 : index
    %23 = vector.load %arg8[%c0_14, %c0_15] : memref<16x128xf32, #tpu.memory_space<vmem>>, vector<16x128xf32>
    tpu.vector_store %arg8[%c0_14, %c0_15], %22 {strides = array<i32>} : memref<16x128xf32, #tpu.memory_space<vmem>>, vector<16x128xf32>,
    %c0_i32_16 = arith.constant 0 : i32
    %24 = arith.cmpi eq, %arg1, %c0_i32_16 : i32
    %25 = arith.extui %24 : i1 to i32
    %c0_i32_17 = arith.constant 0 : i32
    %26 = arith.cmpi ne, %25, %c0_i32_17 : i32
    scf.if %26 {
      %c0_18 = arith.constant 0 : index
      %c0_19 = arith.constant 0 : index
      %27 = vector.load %arg8[%c0_18, %c0_19] : memref<16x128xf32, #tpu.memory_space<vmem>>, vector<16x128xf32>
      %c0_20 = arith.constant 0 : index
      %c0_21 = arith.constant 0 : index
      %28 = vector.load %arg7[%c0_20, %c0_21] : memref<16x128xf32, #tpu.memory_space<vmem>>, vector<16x128xf32>
      tpu.vector_store %arg7[%c0_20, %c0_21], %27 {strides = array<i32>} : memref<16x128xf32, #tpu.memory_space<vmem>>, vector<16x128xf32>,
    } else {
    }
    return
  }
  func.func @transform_0(%arg0: i32, %arg1: i32) -> (i32, i32) {
    %c0_i32 = arith.constant 0 : i32
    %c0_i32_0 = arith.constant 0 : i32
    return %arg0, %c0_i32 : i32, i32
  }
  func.func @transform_1(%arg0: i32, %arg1: i32) -> (i32, i32) {
    %c0_i32 = arith.constant 0 : i32
    %c0_i32_0 = arith.constant 0 : i32
    return %c0_i32, %arg1 : i32, i32
  }
  func.func @transform_2(%arg0: i32, %arg1: i32) -> (i32, i32) {
    %c0_i32 = arith.constant 0 : i32
    %c0_i32_0 = arith.constant 0 : i32
    return %c0_i32, %arg1 : i32, i32
  }
  func.func @transform_3(%arg0: i32, %arg1: i32) -> (i32, i32) {
    %c0_i32 = arith.constant 0 : i32
    %c0_i32_0 = arith.constant 0 : i32
    return %arg1, %c0_i32 : i32, i32
  }
  func.func @transform_4(%arg0: i32, %arg1: i32) -> (i32, i32) {
    %c0_i32 = arith.constant 0 : i32
    %c0_i32_0 = arith.constant 0 : i32
    %c0_i32_1 = arith.constant 0 : i32
    return %c0_i32, %c0_i32_0 : i32, i32
  }
  func.func @transform_5(%arg0: i32, %arg1: i32) -> (i32, i32) {
    %c0_i32 = arith.constant 0 : i32
    %c0_i32_0 = arith.constant 0 : i32
    return %arg0, %c0_i32 : i32, i32
  }
}

</mosaic_0001>

<llo_original>
// kernel: tpu_custom_call.1
$region0: #{tpu_custom_call.1}
  #allocation0 [shape = 'u32[]', space=smem, size = 0x4, offset = 0x4, fixed_abs, tag = 'smem constant byte address 0x4 - core index']
  #allocation1 [shape = 'u32[144,128]{1,0:T(1,128)}', space=vmem, size = 0x12000, scoped, tag = 'internal scratch']
  #allocation2 [shape = 'f32[16,128]{1,0:T(8,128)}', space=vmem, size = 0x2000, scoped, tag = 'scratch operand']
  %s0 = inlined_call_operand.hbm [shape: f32[16,128], index: 0, kind: input, shape index: {}]
  %s1 = inlined_call_operand.hbm [shape: bf16[128,128], index: 1, kind: input, shape index: {}]
  %s2 = inlined_call_operand.vmem [shape: f32[1,128], index: 2, kind: input, shape index: {}]
  %s3 = inlined_call_operand.hbm [shape: bf16[128,128], index: 3, kind: input, shape index: {}]
  %s4 = inlined_call_operand.vmem [shape: f32[1,128], index: 4, kind: input, shape index: {}]
  %s5 = inlined_call_operand.hbm [shape: f32[16,128], index: 5, kind: output, shape index: {}]
  %s6 = sld [smem:[#allocation0]]
  $region50: #{tpu_custom_call.1} parent=0
    _
  %s8 = ssub.s32 1, %s6
  %s9 = scalar_select 0, %s8, %s6
  $region1: #{tpu_custom_call.1} parent=0
    #allocation3 [shape = 'u8[8192]{0}', space=vmem, size = 0x2000, scoped, tag = 'input window, operand 0, single buffered']
    #allocation4 [shape = 's32[1]{0}', space=sflag, size = 0x4, scoped, tag = 'scoped memory for tpu_custom_call.1']
    #allocation5 [shape = 's32[1]{0}', space=sflag, size = 0x4, scoped, tag = 'scoped memory for tpu_custom_call.1']
    #allocation6 [shape = 'u8[32768]{0}', space=vmem, size = 0x8000, scoped, tag = 'input window, operand 1, single buffered']
    #allocation7 [shape = 's32[1]{0}', space=sflag, size = 0x4, scoped, tag = 'scoped memory for tpu_custom_call.1']
    #allocation8 [shape = 'u8[32768]{0}', space=vmem, size = 0x8000, scoped, tag = 'input window, operand 3, single buffered']
    #allocation9 [shape = 'u8[8192]{0}', space=vmem, size = 0x2000, scoped, tag = 'output window, operand 0, single buffered']
    %10 = vsyncpa [#allocation4], 0
    %11 = vsyncpa [#allocation7], 0
    %12 = vsyncpa [#allocation5], 0
    // Predicated region
    $region2: #{tpu_custom_call.1} parent=1 // pred_check
      _
    $region3: #{tpu_custom_call.1} parent=1 // pred_check_branch
      %14 = sbr.rel (0) target = $region5
    $region4: #{tpu_custom_call.1} parent=1 // pred_region
      %s16 = ssub.s32 256, 256
      %17 = vsyncadd [#allocation4], %s16
      %s18 = sshll.u32 [#allocation3], 4
      %s19 = int_to_ptr.vmem [resolvable:$true] %s18
      %24 = dma.hbm_to_vmem [thread:$0]  %s0, 256, %s19, [#allocation4], 128, 128, 8
    $region5: #{tpu_custom_call.1} parent=1 // pred_fallthru
      _
    // Predicated region
    $region6: #{tpu_custom_call.1} parent=1 // pred_check
      _
    $region7: #{tpu_custom_call.1} parent=1 // pred_check_branch
      %26 = sbr.rel (0) target = $region9
    $region8: #{tpu_custom_call.1} parent=1 // pred_region
      %s28 = ssub.s32 1024, 1024
      %29 = vsyncadd [#allocation7], %s28
      %s30 = sshll.u32 [#allocation6], 4
      %s31 = int_to_ptr.vmem [resolvable:$true] %s30
      %36 = dma.hbm_to_vmem [thread:$0]  %s1, 1024, %s31, [#allocation7], 64, 64, 4
    $region9: #{tpu_custom_call.1} parent=1 // pred_fallthru
      _
    // Predicated region
    $region10: #{tpu_custom_call.1} parent=1 // pred_check
      _
    $region11: #{tpu_custom_call.1} parent=1 // pred_check_branch
      %38 = sbr.rel (0) target = $region13
    $region12: #{tpu_custom_call.1} parent=1 // pred_region
      _
    $region13: #{tpu_custom_call.1} parent=1 // pred_fallthru
      _
    // Predicated region
    $region14: #{tpu_custom_call.1} parent=1 // pred_check
      _
    $region15: #{tpu_custom_call.1} parent=1 // pred_check_branch
      %40 = sbr.rel (0) target = $region17
    $region16: #{tpu_custom_call.1} parent=1 // pred_region
      %s42 = ssub.s32 1024, 1024
      %43 = vsyncadd [#allocation7], %s42
      %s44 = sshll.u32 [#allocation8], 4
      %s45 = int_to_ptr.vmem [resolvable:$true] %s44
      %50 = dma.hbm_to_vmem [thread:$0]  %s3, 1024, %s45, [#allocation7], 64, 64, 4
    $region17: #{tpu_custom_call.1} parent=1 // pred_fallthru
      _
    // Predicated region
    $region18: #{tpu_custom_call.1} parent=1 // pred_check
      _
    $region19: #{tpu_custom_call.1} parent=1 // pred_check_branch
      %52 = sbr.rel (0) target = $region21
    $region20: #{tpu_custom_call.1} parent=1 // pred_region
      _
    $region21: #{tpu_custom_call.1} parent=1 // pred_fallthru
      _
    // Predicated region
    $region22: #{tpu_custom_call.1} parent=1 // pred_check
      _
    $region23: #{tpu_custom_call.1} parent=1 // pred_check_branch
      %54 = sbr.rel (0) target = $region25
    $region24: #{tpu_custom_call.1} parent=1 // pred_region
      %55 = dma.done [#allocation4], 256
    $region25: #{tpu_custom_call.1} parent=1 // pred_fallthru
      _
    // Predicated region
    $region26: #{tpu_custom_call.1} parent=1 // pred_check
      _
    $region27: #{tpu_custom_call.1} parent=1 // pred_check_branch
      %57 = sbr.rel (0) target = $region29
    $region28: #{tpu_custom_call.1} parent=1 // pred_region
      %58 = dma.done [#allocation7], 1024
    $region29: #{tpu_custom_call.1} parent=1 // pred_fallthru
      _
    // Predicated region
    $region30: #{tpu_custom_call.1} parent=1 // pred_check
      _
    $region31: #{tpu_custom_call.1} parent=1 // pred_check_branch
      %60 = sbr.rel (0) target = $region33
    $region32: #{tpu_custom_call.1} parent=1 // pred_region
      %61 = dma.done [#allocation7], 1024
    $region33: #{tpu_custom_call.1} parent=1 // pred_fallthru
      _
    %p63 = scmp.eq.s32.totalorder 0, 0
    // Predicated region
    $region34: #{tpu_custom_call.1} parent=1 // pred_check
      %p64 = pneg %p63
    $region35: #{tpu_custom_call.1} parent=1 // pred_check_branch
      %66 = sbr.rel (%p64) target = $region37
    $region36: #{tpu_custom_call.1} parent=1 // pred_region
      %v67 = vld [vmem:[%s4] sm:$0x1]
      %v69 = vlaneseq
      %v70 = vshrl.u32 %v69, 7
      %v71 = vsub.s32 0, %v70
      %v72 = vrot.slane %v67, %v71
      %74 = vst [vmem:[#allocation2] sm:$0xff] %v72
      %75 = vst [vmem:[#allocation2 + $0x8] sm:$0xff] %v72
    $region37: #{tpu_custom_call.1} parent=1 // pred_fallthru
      _
    %v76 = vld [vmem:[#allocation3] sm:$0xff]
    %v77 = vld [vmem:[#allocation3 + $0x8] sm:$0xff]
    %v78 = vpack.c.bf16 %v77, %v76
    %v79 = vld [vmem:[#allocation6] sm:$0xf]
    %v80 = vld [vmem:[#allocation6 + $0x4] sm:$0xf]
    %v81 = vld [vmem:[#allocation6 + $0x8] sm:$0xf]
    %v82 = vld [vmem:[#allocation6 + $0xc] sm:$0xf]
    %v83 = vld [vmem:[#allocation6 + $0x10] sm:$0xf]
    %v84 = vld [vmem:[#allocation6 + $0x14] sm:$0xf]
    %v85 = vld [vmem:[#allocation6 + $0x18] sm:$0xf]
    %v86 = vld [vmem:[#allocation6 + $0x1c] sm:$0xf]
    %v87 = vld [vmem:[#allocation6 + $0x20] sm:$0xf]
    %v88 = vld [vmem:[#allocation6 + $0x24] sm:$0xf]
    %v89 = vld [vmem:[#allocation6 + $0x28] sm:$0xf]
    %v90 = vld [vmem:[#allocation6 + $0x2c] sm:$0xf]
    %v91 = vld [vmem:[#allocation6 + $0x30] sm:$0xf]
    %v92 = vld [vmem:[#allocation6 + $0x34] sm:$0xf]
    %v93 = vld [vmem:[#allocation6 + $0x38] sm:$0xf]
    %v94 = vld [vmem:[#allocation6 + $0x3c] sm:$0xf]
    %v95 = vld [vmem:[%s2] sm:$0x1]
    %v97 = vlaneseq
    %v98 = vshrl.u32 %v97, 7
    %v99 = vsub.s32 0, %v98
    %v100 = vrot.slane %v95, %v99
    %v118 = vunpack.c.l.b16 %v79
    %v119 = vunpack.c.l.b16 %v80
    %v120 = vunpack.c.l.b16 %v81
    %v121 = vunpack.c.l.b16 %v82
    %v122 = vunpack.c.l.b16 %v83
    %v123 = vunpack.c.l.b16 %v84
    %v124 = vunpack.c.l.b16 %v85
    %v125 = vunpack.c.l.b16 %v86
    %v126 = vunpack.c.l.b16 %v87
    %v127 = vunpack.c.l.b16 %v88
    %v128 = vunpack.c.l.b16 %v89
    %v129 = vunpack.c.l.b16 %v90
    %v130 = vunpack.c.l.b16 %v91
    %v131 = vunpack.c.l.b16 %v92
    %v132 = vunpack.c.l.b16 %v93
    %v133 = vunpack.c.l.b16 %v94
    %v134 = vpack.c.b16 %v119, %v118
    %v135 = vpack.c.b16 %v121, %v120
    %v136 = vpack.c.b16 %v123, %v122
    %v137 = vpack.c.b16 %v125, %v124
    %v138 = vpack.c.b16 %v127, %v126
    %v139 = vpack.c.b16 %v129, %v128
    %v140 = vpack.c.b16 %v131, %v130
    %v141 = vpack.c.b16 %v133, %v132
    %150 = vmatprep.subr.bf16.mxu0 0
    %151 = vmatpush1.bf16.msra.mxu0 %v134
    %152 = vmatprep.subr.bf16.mxu0 0
    %153 = vmatpush1.bf16.msra.mxu0 %v135
    %154 = vmatprep.subr.bf16.mxu0 0
    %155 = vmatpush1.bf16.msra.mxu0 %v136
    %156 = vmatprep.subr.bf16.mxu0 0
    %157 = vmatpush1.bf16.msra.mxu0 %v137
    %158 = vmatprep.subr.bf16.mxu0 0
    %159 = vmatpush1.bf16.msra.mxu0 %v138
    %160 = vmatprep.subr.bf16.mxu0 0
    %161 = vmatpush1.bf16.msra.mxu0 %v139
    %162 = vmatprep.subr.bf16.mxu0 0
    %163 = vmatpush1.bf16.msra.mxu0 %v140
    %164 = vmatprep.subr.bf16.mxu0 0
    %165 = vmatpush1.bf16.msra.mxu0 %v141
    %166 = vmatprep.subr.bf16.mxu0 0
    %167 = vmatpush1.bf16.msra.mxu0 0
    %168 = vmatprep.subr.bf16.mxu0 0
    %169 = vmatpush1.bf16.msra.mxu0 0
    %170 = vmatprep.subr.bf16.mxu0 0
    %171 = vmatpush1.bf16.msra.mxu0 0
    %172 = vmatprep.subr.bf16.mxu0 0
    %173 = vmatpush1.bf16.msra.mxu0 0
    %174 = vmatprep.subr.bf16.mxu0 0
    %175 = vmatpush1.bf16.msra.mxu0 0
    %176 = vmatprep.subr.bf16.mxu0 0
    %177 = vmatpush1.bf16.msra.mxu0 0
    %178 = vmatprep.subr.bf16.mxu0 0
    %179 = vmatpush1.bf16.msra.mxu0 0
    %180 = vmatprep.subr.bf16.mxu0 0
    %181 = vmatpush1.bf16.msra.mxu0 0
    %182 = vmatprep.mubr.bf16.mxu0 0
    %183 = vmatmul.mubr.bf16.gmra.mrb[0].mxu0 %v78
    %v184 = vpop.f32.mrb[0].mxu0
    %v185 = vadd.f32 %v100, %v184
    %v186 = vpop.f32.mrb[0].mxu0
    %v187 = vpop.f32.mrb[0].mxu0
    %v188 = vadd.f32 %v100, %v187
    %v189 = vpop.f32.mrb[0].mxu0
    %190 = vdwg.mxu0
    %v191 = vmul.f32 %v185, 0.5
    %v192 = vmul.f32 %v188, 0.5
    %v193 = vmul.f32 %v185, 0.70710677
    %v194 = vmul.f32 %v188, 0.70710677
    %v195 = verf.f32.pop %v193
    %v196 = verf.f32.pop %v194
    %v197 = vadd.f32 %v195, 1.0
    %v198 = vadd.f32 %v196, 1.0
    %v199 = vmul.f32 %v191, %v197
    %v200 = vmul.f32 %v192, %v198
    %v201 = vld [vmem:[#allocation2] sm:$0xff]
    %v202 = vld [vmem:[#allocation2 + $0x8] sm:$0xff]
    %v203 = vpack.c.bf16 %v200, %v199
    %v204 = vld [vmem:[#allocation8] sm:$0xf]
    %v205 = vld [vmem:[#allocation8 + $0x4] sm:$0xf]
    %v206 = vld [vmem:[#allocation8 + $0x8] sm:$0xf]
    %v207 = vld [vmem:[#allocation8 + $0xc] sm:$0xf]
    %v208 = vld [vmem:[#allocation8 + $0x10] sm:$0xf]
    %v209 = vld [vmem:[#allocation8 + $0x14] sm:$0xf]
    %v210 = vld [vmem:[#allocation8 + $0x18] sm:$0xf]
    %v211 = vld [vmem:[#allocation8 + $0x1c] sm:$0xf]
    %v212 = vld [vmem:[#allocation8 + $0x20] sm:$0xf]
    %v213 = vld [vmem:[#allocation8 + $0x24] sm:$0xf]
    %v214 = vld [vmem:[#allocation8 + $0x28] sm:$0xf]
    %v215 = vld [vmem:[#allocation8 + $0x2c] sm:$0xf]
    %v216 = vld [vmem:[#allocation8 + $0x30] sm:$0xf]
    %v217 = vld [vmem:[#allocation8 + $0x34] sm:$0xf]
    %v218 = vld [vmem:[#allocation8 + $0x38] sm:$0xf]
    %v219 = vld [vmem:[#allocation8 + $0x3c] sm:$0xf]
    %v236 = vunpack.c.l.b16 %v204
    %v237 = vunpack.c.l.b16 %v205
    %v238 = vunpack.c.l.b16 %v206
    %v239 = vunpack.c.l.b16 %v207
    %v240 = vunpack.c.l.b16 %v208
    %v241 = vunpack.c.l.b16 %v209
    %v242 = vunpack.c.l.b16 %v210
    %v243 = vunpack.c.l.b16 %v211
    %v244 = vunpack.c.l.b16 %v212
    %v245 = vunpack.c.l.b16 %v213
    %v246 = vunpack.c.l.b16 %v214
    %v247 = vunpack.c.l.b16 %v215
    %v248 = vunpack.c.l.b16 %v216
    %v249 = vunpack.c.l.b16 %v217
    %v250 = vunpack.c.l.b16 %v218
    %v251 = vunpack.c.l.b16 %v219
    %v252 = vpack.c.b16 %v237, %v236
    %v253 = vpack.c.b16 %v239, %v238
    %v254 = vpack.c.b16 %v241, %v240
    %v255 = vpack.c.b16 %v243, %v242
    %v256 = vpack.c.b16 %v245, %v244
    %v257 = vpack.c.b16 %v247, %v246
    %v258 = vpack.c.b16 %v249, %v248
    %v259 = vpack.c.b16 %v251, %v250
    %268 = vmatprep.subr.bf16.mxu0 0
    %269 = vmatpush1.bf16.msra.mxu0 %v252
    %270 = vmatprep.subr.bf16.mxu0 0
    %271 = vmatpush1.bf16.msra.mxu0 %v253
    %272 = vmatprep.subr.bf16.mxu0 0
    %273 = vmatpush1.bf16.msra.mxu0 %v254
    %274 = vmatprep.subr.bf16.mxu0 0
    %275 = vmatpush1.bf16.msra.mxu0 %v255
    %276 = vmatprep.subr.bf16.mxu0 0
    %277 = vmatpush1.bf16.msra.mxu0 %v256
    %278 = vmatprep.subr.bf16.mxu0 0
    %279 = vmatpush1.bf16.msra.mxu0 %v257
    %280 = vmatprep.subr.bf16.mxu0 0
    %281 = vmatpush1.bf16.msra.mxu0 %v258
    %282 = vmatprep.subr.bf16.mxu0 0
    %283 = vmatpush1.bf16.msra.mxu0 %v259
    %284 = vmatprep.subr.bf16.mxu0 0
    %285 = vmatpush1.bf16.msra.mxu0 0
    %286 = vmatprep.subr.bf16.mxu0 0
    %287 = vmatpush1.bf16.msra.mxu0 0
    %288 = vmatprep.subr.bf16.mxu0 0
    %289 = vmatpush1.bf16.msra.mxu0 0
    %290 = vmatprep.subr.bf16.mxu0 0
    %291 = vmatpush1.bf16.msra.mxu0 0
    %292 = vmatprep.subr.bf16.mxu0 0
    %293 = vmatpush1.bf16.msra.mxu0 0
    %294 = vmatprep.subr.bf16.mxu0 0
    %295 = vmatpush1.bf16.msra.mxu0 0
    %296 = vmatprep.subr.bf16.mxu0 0
    %297 = vmatpush1.bf16.msra.mxu0 0
    %298 = vmatprep.subr.bf16.mxu0 0
    %299 = vmatpush1.bf16.msra.mxu0 0
    %300 = vmatprep.mubr.bf16.mxu0 0
    %301 = vmatmul.mubr.bf16.gmra.mrb[0].mxu0 %v203
    %v302 = vpop.f32.mrb[0].mxu0
    %v303 = vadd.f32 0.0, %v302
    %v304 = vpop.f32.mrb[0].mxu0
    %v305 = vpop.f32.mrb[0].mxu0
    %v306 = vadd.f32 0.0, %v305
    %v307 = vpop.f32.mrb[0].mxu0
    %308 = vdwg.mxu0
    %v309 = vadd.f32 %v201, %v303
    %v310 = vadd.f32 %v202, %v306
    %311 = vst [vmem:[#allocation2] sm:$0xff] %v309
    %312 = vst [vmem:[#allocation2 + $0x8] sm:$0xff] %v310
    // Predicated region
    $region38: #{tpu_custom_call.1} parent=1 // pred_check
      %p313 = pneg %p63
    $region39: #{tpu_custom_call.1} parent=1 // pred_check_branch
      %315 = sbr.rel (%p313) target = $region41
    $region40: #{tpu_custom_call.1} parent=1 // pred_region
      %v316 = vld [vmem:[#allocation2] sm:$0xff]
      %v317 = vld [vmem:[#allocation2 + $0x8] sm:$0xff]
      %318 = vst [vmem:[#allocation9] sm:$0xff] %v316
      %319 = vst [vmem:[#allocation9 + $0x8] sm:$0xff] %v317
    $region41: #{tpu_custom_call.1} parent=1 // pred_fallthru
      _
    // Predicated region
    $region42: #{tpu_custom_call.1} parent=1 // pred_check
      _
    $region43: #{tpu_custom_call.1} parent=1 // pred_check_branch
      %321 = sbr.rel (0) target = $region45
    $region44: #{tpu_custom_call.1} parent=1 // pred_region
      %s323 = ssub.s32 256, 256
      %324 = vsyncadd [#allocation5], %s323
      %s325 = sshll.u32 [#allocation9], 4
      %s326 = int_to_ptr.vmem [resolvable:$true] %s325
      %331 = dma.vmem_to_hbm [thread:$0]  %s326, 256, %s5, [#allocation5], 128, 128, 8
    $region45: #{tpu_custom_call.1} parent=1 // pred_fallthru
      _
    // Predicated region
    $region46: #{tpu_custom_call.1} parent=1 // pred_check
      _
    $region47: #{tpu_custom_call.1} parent=1 // pred_check_branch
      %333 = sbr.rel (0) target = $region49
    $region48: #{tpu_custom_call.1} parent=1 // pred_region
      %334 = dma.done [#allocation5], 256
    $region49: #{tpu_custom_call.1} parent=1 // pred_fallthru
      _
    %335 = vsyncpa [#allocation4], 1
    %336 = vsyncpa [#allocation7], 1
    %337 = vsyncpa [#allocation5], 1

</llo_original>
